<compile_context>
chip_gen: v7x
topology: tpu7x:2x2x1
jax: 0.10.0
libtpu: 0.0.40
codegen_flags: <defaults>
</compile_context>

<pallas_src>
import jax
import jax.numpy as jnp
import numpy as np
from jax.experimental import pallas as pl
from jax.experimental.pallas import tpu as pltpu


def _round_up(x, m):
    return ((x + m - 1) // m) * m


def _make_textcnn_kernel(TB, D, Kmax, L_f, Lmin, KDp, F, needs_mask):
    """Fused im2col-conv + max-pool + bias/ReLU + FC for one (TB, Lp, D) batch tile."""
    KD = Kmax * D

    def kernel(*refs):
        if needs_mask:
            (emb_ref, w2d_ref, bconv_ref, tail_ref, fcw_ref, fcb_ref,
             out_ref, col_ref) = refs
        else:
            (emb_ref, w2d_ref, bconv_ref, fcw_ref, fcb_ref,
             out_ref, col_ref) = refs
            tail_ref = None

        # ---- im2col: all Kmax shifted windows in ONE explicit pass -------------
        for k in range(Kmax):                                  # small & static
            col_ref[:, :, k * D:(k + 1) * D] = emb_ref[:, k:k + L_f, :]
        if KDp > KD:                                           # zero the lane padding
            col_ref[:, :, KD:] = jnp.zeros((TB, L_f, KDp - KD), jnp.bfloat16)

        # ---- fused conv for ALL K-branches: one deep-contraction MXU matmul ----
        win = col_ref[...].reshape(TB * L_f, KDp)              # bf16
        acc = jnp.dot(win, w2d_ref[...],
                      preferred_element_type=jnp.float32)      # (TB*L_f, F) f32
        acc = acc.reshape(TB, L_f, F)

        # ---- max-pool over time: unmasked common prefix + (tiny) masked tail ---
        pooled = jnp.max(acc[:, :Lmin, :], axis=1)             # (TB, F) f32
        if needs_mask:
            tail = acc[:, Lmin:, :] + tail_ref[...][None, :, :]
            pooled = jnp.maximum(pooled, jnp.max(tail, axis=1))

        # bias + ReLU after the pool: exact ONLY because the conv bias is
        # per-channel (time-invariant) and max/ReLU are monotone.  Do not reuse
        # this trick for a per-position bias.
        pooled = jnp.maximum(pooled + bconv_ref[...], 0.0)

        # TODO(synk): dropout is the eval-mode identity (no RNG mask); nn.BatchNorm2d
        # is constructed in __init__ but never used in forward(), so it is omitted.
        logits = jnp.dot(pooled.astype(jnp.bfloat16), fcw_ref[...],
                         preferred_element_type=jnp.float32)
        out_ref[...] = logits + fcb_ref[...]                   # (TB, Cp) lane-dense

    return kernel


def textcnn_forward(tokens, embed_w, conv_ws, conv_bs, fc_w, fc_b, *, Ks):
    B, L = tokens.shape
    V, D = embed_w.shape
    Co = conv_ws[0].shape[-1]
    C = fc_w.shape[1]
    nK = len(Ks)
    Kmax = max(Ks)

    pads = [(K - 1) // 2 for K in Ks]                 # torch padding=((K-1)//2, 0)
    louts = [L + 2 * p - K + 1 for K, p in zip(Ks, pads)]
    left_pad = max(pads)
    L_f = max(louts)                                  # fused conv output length
    Lmin = min(louts)                                 # common valid prefix
    Lp = max(L + 2 * left_pad, L_f + Kmax - 1)        # padded sequence length
    right_pad = Lp - L - left_pad
    needs_mask = Lmin < L_f                           # only for mixed-parity Ks

    F = _round_up(nK * Co, 128)                       # lane-padded feature width
    Cp = _round_up(C, 128)                            # lane-padded class width
    KD = Kmax * D
    KDp = _round_up(KD, 128)                          # lane-padded im2col depth

    # ---- fuse / pad the weights into im2col layout (one-time host-side glue) ---
    w2d_np = np.zeros((KDp, F), np.float32)           # rows [k*D:(k+1)*D] = tap k
    b_np = np.zeros((1, F), np.float32)
    tail_np = np.zeros((max(L_f - Lmin, 1), F), np.float32)
    for i, (K, p, lo) in enumerate(zip(Ks, pads, louts)):
        off = left_pad - p                            # align branch i inside Kmax taps
        wi = np.asarray(conv_ws[i], np.float32)       # (K, D, Co)
        w2d_np[off * D:(off + K) * D, i * Co:(i + 1) * Co] = wi.reshape(K * D, Co)
        b_np[:, i * Co:(i + 1) * Co] = np.asarray(conv_bs[i], np.float32).reshape(1, Co)
        if lo < L_f:                                  # -inf on this branch's invalid tail rows
            tail_np[max(lo - Lmin, 0):, i * Co:(i + 1) * Co] = -np.inf

    fcw_np = np.zeros((F, Cp), np.float32)
    fcw_np[:nK * Co, :C] = np.asarray(fc_w, np.float32)
    fcb_np = np.zeros((1, Cp), np.float32)
    fcb_np[:, :C] = np.asarray(fc_b, np.float32).reshape(1, C)

    w2d = jnp.asarray(w2d_np).astype(jnp.bfloat16)    # bf16 MXU operands
    b_fused = jnp.asarray(b_np)
    fcw_p = jnp.asarray(fcw_np).astype(jnp.bfloat16)
    fcb_p = jnp.asarray(fcb_np)

    # ---- generation-aware batch tile -------------------------------------------
    try:
        vmem_cap = int(pltpu.get_tpu_info().vmem_capacity_bytes)
    except Exception:
        vmem_cap = 64 * 2 ** 20                       # conservative (v7x-sized) fallback
    big_vmem = vmem_cap >= 96 * 2 ** 20               # v5e / v6e (128 MiB) vs v7x (64 MiB)

    weight_bytes = 2 * ((KDp * F + F * Cp) * 2 + (F + Cp) * 4)    # dbl-buffered invariants
    if needs_mask:
        weight_bytes += 2 * (L_f - Lmin) * F * 4
    per_row = (2 * Lp * D * 2            # emb block, double-buffered, bf16
               + 2 * L_f * KDp * 2       # im2col scratch + live window value, bf16
               + 2 * L_f * F * 4         # f32 matmul result + pool temps
               + 2 * Cp * 4)             # out block, double-buffered, f32
    if big_vmem:
        budget, limit_cap, tb_cap = 40 * 2 ** 20, 96 * 2 ** 20, 512
    else:
        budget, limit_cap, tb_cap = 14 * 2 ** 20, 48 * 2 ** 20, 256

    TB = min(B, tb_cap, max(1, (budget - weight_bytes) // per_row))
    if (not big_vmem) and B > 8:
        # v7x megacore: keep >=2 grid steps so ("parallel",) feeds both TensorCores.
        TB = min(TB, _round_up(-(-B // 2), 8))
    if TB < B:
        TB = max(8, (TB // 8) * 8)       # keep the out-block sublane dim 8-aligned
    Bp = _round_up(B, TB)
    grid = (Bp // TB,)

    vmem_limit = int(min(max(2 * (TB * per_row + weight_bytes), 16 * 2 ** 20), limit_cap))

    # ---- embedding gather with the zero-pad folded in (single HBM write) -------
    # Row V of the extended table is all-zero == Conv2d's implicit zero padding;
    # batch padding rows also map to it.
    emb_tab = jnp.concatenate(
        [jnp.asarray(embed_w, jnp.float32).astype(jnp.bfloat16),
         jnp.zeros((1, D), jnp.bfloat16)], axis=0)
    tok = jnp.pad(tokens.astype(jnp.int32), ((0, Bp - B), (left_pad, right_pad)),
                  constant_values=V)
    emb = jnp.take(emb_tab, tok, axis=0)              # (Bp, Lp, D) bf16
    # TODO(synk): fuse this gather into the kernel (PrefetchScalarGridSpec token ids +
    # manual make_async_copy row gather from embed_w in HBM) to drop one more HBM pass.

    kernel = _make_textcnn_kernel(TB, D, Kmax, L_f, Lmin, KDp, F, needs_mask)

    inputs = [emb, w2d, b_fused]
    in_specs = [
        pl.BlockSpec((TB, Lp, D), lambda i: (i, 0, 0)),       # pipelined over batch
        pl.BlockSpec((KDp, F), lambda i: (0, 0)),             # grid-invariant weights
        pl.BlockSpec((1, F), lambda i: (0, 0)),
    ]
    if needs_mask:
        inputs.append(jnp.asarray(tail_np))
        in_specs.append(pl.BlockSpec((L_f - Lmin, F), lambda i: (0, 0)))
    inputs += [fcw_p, fcb_p]
    in_specs += [
        pl.BlockSpec((F, Cp), lambda i: (0, 0)),
        pl.BlockSpec((1, Cp), lambda i: (0, 0)),
    ]

    cost = pl.CostEstimate(
        flops=int(2 * Bp * L_f * KDp * F + 2 * Bp * F * Cp),
        transcendentals=0,
        bytes_accessed=int(Bp * Lp * D * 2 + Bp * Cp * 4
                           + (KDp * F + F * Cp) * 2 + (F + Cp) * 4),
    )

    out = pl.pallas_call(
        kernel,
        out_shape=jax.ShapeDtypeStruct((Bp, Cp), jnp.float32),
        grid=grid,
        in_specs=in_specs,
        out_specs=pl.BlockSpec((TB, Cp), lambda i: (i, 0)),
        scratch_shapes=[pltpu.VMEM((TB, L_f, KDp), jnp.bfloat16)],   # im2col buffer
        compiler_params=pltpu.CompilerParams(
            dimension_semantics=("parallel",),                # batch tiles: 2 TCs on v7x
            vmem_limit_bytes=vmem_limit),
        cost_estimate=cost,
    )(*inputs)

    return out[:B, :C]


def textcnn_reference(tokens, embed_w, conv_ws, conv_bs, fc_w, fc_b, *, Ks):
    """Pure-JAX f32 reference matching the PyTorch forward()."""
    emb = jnp.take(embed_w, tokens, axis=0)                   # (B, L, D)
    feats = []
    for K, w, b in zip(Ks, conv_ws, conv_bs):
        p = (K - 1) // 2
        xp = jnp.pad(emb, ((0, 0), (p, p), (0, 0)))
        L_out = emb.shape[1] + 2 * p - K + 1
        conv = sum(jnp.einsum("btd,dc->btc", xp[:, k:k + L_out, :], w[k])
                   for k in range(K)) + jnp.reshape(b, (1, 1, -1))
        feats.append(jnp.max(jax.nn.relu(conv), axis=1))      # (B, Co)
    x = jnp.concatenate(feats, axis=1)                        # (B, len(Ks)*Co)
    return x @ fc_w + jnp.reshape(fc_b, (1, -1))


if __name__ == "__main__":
    # Small, module-consistent shapes.
    B, L = 2, 16          # batch, sequence length
    V, D = 50, 32         # vocab size, embedding dim
    Co = 8                # conv out channels (Ci is always 1)
    Ks = (3, 5)           # filter heights
    C = 4                 # number of classes

    key = jax.random.PRNGKey(0)
    keys = jax.random.split(key, 8)

    embed_w = jax.random.normal(keys[0], (V, D), jnp.float32) * 0.1
    conv_ws = [jax.random.normal(keys[1 + i], (K, D, Co), jnp.float32) * 0.1
               for i, K in enumerate(Ks)]
    conv_bs = [jax.random.normal(keys[3 + i], (1, Co), jnp.float32) * 0.1
               for i in range(len(Ks))]
    fc_w = jax.random.normal(keys[5], (len(Ks) * Co, C), jnp.float32) * 0.1
    fc_b = jax.random.normal(keys[6], (1, C), jnp.float32) * 0.1
    tokens = jax.random.randint(keys[7], (B, L), 0, V, dtype=jnp.int32)

    out = textcnn_forward(tokens, embed_w, conv_ws, conv_bs, fc_w, fc_b, Ks=Ks)
    out = jax.block_until_ready(out)
    assert out.shape == (B, C) and out.dtype == jnp.float32

    ref = textcnn_reference(tokens, embed_w, conv_ws, conv_bs, fc_w, fc_b, Ks=Ks)
    np.testing.assert_allclose(np.asarray(out), np.asarray(ref), atol=5e-2, rtol=5e-2)
    print("KERNEL_OK")
</pallas_src>

<mosaic_0001>
module attributes {stable_mosaic.version = 11 : i64} {
  func.func @kernel(%arg0: i32, %arg1: memref<2x20x32xbf16, #tpu.memory_space<vmem>>, %arg2: memref<256x128xbf16, #tpu.memory_space<vmem>>, %arg3: memref<1x128xf32, #tpu.memory_space<vmem>>, %arg4: memref<128x128xbf16, #tpu.memory_space<vmem>>, %arg5: memref<1x128xf32, #tpu.memory_space<vmem>>, %arg6: memref<2x128xf32, #tpu.memory_space<vmem>>, %arg7: memref<2x16x256xbf16, #tpu.memory_space<vmem>>) attributes {dimension_semantics = [#tpu.dimension_semantics<parallel>], iteration_bounds = array<i64: 1>, scalar_prefetch = 0 : i64, scratch_operands = 1 : i64, tpu.core_type = #tpu.core_type<tc>, window_params = [{transform_indices = @transform_0, window_bounds = array<i64: 2, 20, 32>}, {pipeline_mode = #tpu.pipeline_mode<synchronous>, transform_indices = @transform_1, window_bounds = array<i64: 256, 128>}, {pipeline_mode = #tpu.pipeline_mode<synchronous>, transform_indices = @transform_2, window_bounds = array<i64: 1, 128>}, {pipeline_mode = #tpu.pipeline_mode<synchronous>, transform_indices = @transform_3, window_bounds = array<i64: 128, 128>}, {pipeline_mode = #tpu.pipeline_mode<synchronous>, transform_indices = @transform_4, window_bounds = array<i64: 1, 128>}, {transform_indices = @transform_5, window_bounds = array<i64: 2, 128>}]} {
    %c0 = arith.constant 0 : index
    %c0_0 = arith.constant 0 : index
    %c0_1 = arith.constant 0 : index
    %0 = vector.load %arg1[%c0, %c0_0, %c0_1] : memref<2x20x32xbf16, #tpu.memory_space<vmem>>, vector<2x16x32xbf16>
    %c0_2 = arith.constant 0 : index
    %c0_3 = arith.constant 0 : index
    %c0_4 = arith.constant 0 : index
    %1 = vector.load %arg7[%c0_2, %c0_3, %c0_4] : memref<2x16x256xbf16, #tpu.memory_space<vmem>>, vector<2x16x32xbf16>
    tpu.vector_store %arg7[%c0_2, %c0_3, %c0_4], %0 {strides = array<i32>} : memref<2x16x256xbf16, #tpu.memory_space<vmem>>, vector<2x16x32xbf16>,
    %c0_5 = arith.constant 0 : index
    %c1 = arith.constant 1 : index
    %c0_6 = arith.constant 0 : index
    %2 = vector.load %arg1[%c0_5, %c1, %c0_6] : memref<2x20x32xbf16, #tpu.memory_space<vmem>>, vector<2x16x32xbf16>
    %c0_7 = arith.constant 0 : index
    %c0_8 = arith.constant 0 : index
    %c32 = arith.constant 32 : index
    %3 = vector.load %arg7[%c0_7, %c0_8, %c32] : memref<2x16x256xbf16, #tpu.memory_space<vmem>>, vector<2x16x32xbf16>
    tpu.vector_store %arg7[%c0_7, %c0_8, %c32], %2 {strides = array<i32>} : memref<2x16x256xbf16, #tpu.memory_space<vmem>>, vector<2x16x32xbf16>,
    %c0_9 = arith.constant 0 : index
    %c2 = arith.constant 2 : index
    %c0_10 = arith.constant 0 : index
    %4 = vector.load %arg1[%c0_9, %c2, %c0_10] : memref<2x20x32xbf16, #tpu.memory_space<vmem>>, vector<2x16x32xbf16>
    %c0_11 = arith.constant 0 : index
    %c0_12 = arith.constant 0 : index
    %c64 = arith.constant 64 : index
    %5 = vector.load %arg7[%c0_11, %c0_12, %c64] : memref<2x16x256xbf16, #tpu.memory_space<vmem>>, vector<2x16x32xbf16>
    tpu.vector_store %arg7[%c0_11, %c0_12, %c64], %4 {strides = array<i32>} : memref<2x16x256xbf16, #tpu.memory_space<vmem>>, vector<2x16x32xbf16>,
    %c0_13 = arith.constant 0 : index
    %c3 = arith.constant 3 : index
    %c0_14 = arith.constant 0 : index
    %6 = vector.load %arg1[%c0_13, %c3, %c0_14] : memref<2x20x32xbf16, #tpu.memory_space<vmem>>, vector<2x16x32xbf16>
    %c0_15 = arith.constant 0 : index
    %c0_16 = arith.constant 0 : index
    %c96 = arith.constant 96 : index
    %7 = vector.load %arg7[%c0_15, %c0_16, %c96] : memref<2x16x256xbf16, #tpu.memory_space<vmem>>, vector<2x16x32xbf16>
    tpu.vector_store %arg7[%c0_15, %c0_16, %c96], %6 {strides = array<i32>} : memref<2x16x256xbf16, #tpu.memory_space<vmem>>, vector<2x16x32xbf16>,
    %c0_17 = arith.constant 0 : index
    %c4 = arith.constant 4 : index
    %c0_18 = arith.constant 0 : index
    %8 = vector.load %arg1[%c0_17, %c4, %c0_18] : memref<2x20x32xbf16, #tpu.memory_space<vmem>>, vector<2x16x32xbf16>
    %c0_19 = arith.constant 0 : index
    %c0_20 = arith.constant 0 : index
    %c128 = arith.constant 128 : index
    %9 = vector.load %arg7[%c0_19, %c0_20, %c128] : memref<2x16x256xbf16, #tpu.memory_space<vmem>>, vector<2x16x32xbf16>
    tpu.vector_store %arg7[%c0_19, %c0_20, %c128], %8 {strides = array<i32>} : memref<2x16x256xbf16, #tpu.memory_space<vmem>>, vector<2x16x32xbf16>,
    %cst = arith.constant 0.000000e+00 : bf16
    %10 = vector.broadcast %cst : bf16 to vector<2x16x96xbf16>
    %c0_21 = arith.constant 0 : index
    %c0_22 = arith.constant 0 : index
    %c160 = arith.constant 160 : index
    %11 = vector.load %arg7[%c0_21, %c0_22, %c160] : memref<2x16x256xbf16, #tpu.memory_space<vmem>>, vector<2x16x96xbf16>
    tpu.vector_store %arg7[%c0_21, %c0_22, %c160], %10 {strides = array<i32>} : memref<2x16x256xbf16, #tpu.memory_space<vmem>>, vector<2x16x96xbf16>,
    %c0_23 = arith.constant 0 : index
    %c0_24 = arith.constant 0 : index
    %c0_25 = arith.constant 0 : index
    %12 = vector.load %arg7[%c0_23, %c0_24, %c0_25] : memref<2x16x256xbf16, #tpu.memory_space<vmem>>, vector<2x16x256xbf16>
    %13 = vector.shape_cast %12 : vector<2x16x256xbf16> to vector<32x256xbf16>
    %c0_26 = arith.constant 0 : index
    %c0_27 = arith.constant 0 : index
    %14 = vector.load %arg2[%c0_26, %c0_27] : memref<256x128xbf16, #tpu.memory_space<vmem>>, vector<256x128xbf16>
    %cst_28 = arith.constant dense<0.000000e+00> : vector<32x128xf32>
    %15 = tpu.matmul %13, %14, %cst_28 {dimension_numbers = #tpu.dot_dimension_numbers<[1], [0], [0], [1], [0, 0, 1, 1], [], []>} : vector<32x256xbf16>, vector<256x128xbf16>, vector<32x128xf32> -> vector<32x128xf32>
    %16 = vector.shape_cast %15 : vector<32x128xf32> to vector<2x16x128xf32>
    %cst_29 = arith.constant dense<0xFF800000> : vector<2x128xf32>
    %17 = vector.multi_reduction <maximumf>, %16, %cst_29 [1] : vector<2x16x128xf32> to vector<2x128xf32>
    %c0_30 = arith.constant 0 : index
    %c0_31 = arith.constant 0 : index
    %18 = vector.load %arg3[%c0_30, %c0_31] : memref<1x128xf32, #tpu.memory_space<vmem>>, vector<1x128xf32>
    %19 = vector.broadcast %18 : vector<1x128xf32> to vector<2x128xf32>
    %20 = arith.addf %17, %19 : vector<2x128xf32>
    %cst_32 = arith.constant 0.000000e+00 : f32
    %21 = vector.broadcast %cst_32 : f32 to vector<2x128xf32>
    %22 = arith.maximumf %20, %21 : vector<2x128xf32>
    %23 = arith.truncf %22 : vector<2x128xf32> to vector<2x128xbf16>
    %c0_33 = arith.constant 0 : index
    %c0_34 = arith.constant 0 : index
    %24 = vector.load %arg4[%c0_33, %c0_34] : memref<128x128xbf16, #tpu.memory_space<vmem>>, vector<128x128xbf16>
    %cst_35 = arith.constant dense<0.000000e+00> : vector<2x128xf32>
    %25 = tpu.matmul %23, %24, %cst_35 {dimension_numbers = #tpu.dot_dimension_numbers<[1], [0], [0], [1], [0, 0, 1, 1], [], []>} : vector<2x128xbf16>, vector<128x128xbf16>, vector<2x128xf32> -> vector<2x128xf32>
    %c0_36 = arith.constant 0 : index
    %c0_37 = arith.constant 0 : index
    %26 = vector.load %arg5[%c0_36, %c0_37] : memref<1x128xf32, #tpu.memory_space<vmem>>, vector<1x128xf32>
    %27 = vector.broadcast %26 : vector<1x128xf32> to vector<2x128xf32>
    %28 = arith.addf %25, %27 : vector<2x128xf32>
    %c0_38 = arith.constant 0 : index
    %c0_39 = arith.constant 0 : index
    %29 = vector.load %arg6[%c0_38, %c0_39] : memref<2x128xf32, #tpu.memory_space<vmem>>, vector<2x128xf32>
    tpu.vector_store %arg6[%c0_38, %c0_39], %28 {strides = array<i32>} : memref<2x128xf32, #tpu.memory_space<vmem>>, vector<2x128xf32>,
    return
  }
  func.func @transform_0(%arg0: i32) -> (i32, i32, i32) {
    %c0_i32 = arith.constant 0 : i32
    %c0_i32_0 = arith.constant 0 : i32
    %c0_i32_1 = arith.constant 0 : i32
    return %arg0, %c0_i32, %c0_i32_0 : i32, i32, i32
  }
  func.func @transform_1(%arg0: i32) -> (i32, i32) {
    %c0_i32 = arith.constant 0 : i32
    %c0_i32_0 = arith.constant 0 : i32
    %c0_i32_1 = arith.constant 0 : i32
    return %c0_i32, %c0_i32_0 : i32, i32
  }
  func.func @transform_2(%arg0: i32) -> (i32, i32) {
    %c0_i32 = arith.constant 0 : i32
    %c0_i32_0 = arith.constant 0 : i32
    %c0_i32_1 = arith.constant 0 : i32
    return %c0_i32, %c0_i32_0 : i32, i32
  }
  func.func @transform_3(%arg0: i32) -> (i32, i32) {
    %c0_i32 = arith.constant 0 : i32
    %c0_i32_0 = arith.constant 0 : i32
    %c0_i32_1 = arith.constant 0 : i32
    return %c0_i32, %c0_i32_0 : i32, i32
  }
  func.func @transform_4(%arg0: i32) -> (i32, i32) {
    %c0_i32 = arith.constant 0 : i32
    %c0_i32_0 = arith.constant 0 : i32
    %c0_i32_1 = arith.constant 0 : i32
    return %c0_i32, %c0_i32_0 : i32, i32
  }
  func.func @transform_5(%arg0: i32) -> (i32, i32) {
    %c0_i32 = arith.constant 0 : i32
    %c0_i32_0 = arith.constant 0 : i32
    return %arg0, %c0_i32 : i32, i32
  }
}

</mosaic_0001>

<llo_original>
// kernel: tpu_custom_call.1
$region0: #{tpu_custom_call.1}
  #allocation0 [shape = 'u32[]', space=smem, size = 0x4, offset = 0x4, fixed_abs, tag = 'smem constant byte address 0x4 - core index']
  #allocation1 [shape = 'u32[144,128]{1,0:T(1,128)}', space=vmem, size = 0x12000, scoped, tag = 'internal scratch']
  #allocation2 [shape = 'bf16[2,16,256]{2,1,0:T(16,128)(2,1)}', space=vmem, size = 0x4000, scoped, tag = 'scratch operand']
  %s0 = inlined_call_operand.vmem [shape: bf16[2,20,32], index: 0, kind: input, shape index: {}]
  %s1 = inlined_call_operand.hbm [shape: bf16[256,128], index: 1, kind: input, shape index: {}]
  %s2 = inlined_call_operand.vmem [shape: f32[1,128], index: 2, kind: input, shape index: {}]
  %s3 = inlined_call_operand.hbm [shape: bf16[128,128], index: 3, kind: input, shape index: {}]
  %s4 = inlined_call_operand.vmem [shape: f32[1,128], index: 4, kind: input, shape index: {}]
  %s5 = inlined_call_operand.hbm [shape: f32[2,128], index: 5, kind: output, shape index: {}]
  %s6 = sld [smem:[#allocation0]]
  $region38: #{tpu_custom_call.1} parent=0
    _
  %s8 = ssub.s32 1, %s6
  %s9 = scalar_select 0, %s8, %s6
  $region1: #{tpu_custom_call.1} parent=0
    #allocation3 [shape = 'u8[65536]{0}', space=vmem, size = 0x10000, scoped, tag = 'input window, operand 1, single buffered']
    #allocation4 [shape = 's32[1]{0}', space=sflag, size = 0x4, scoped, tag = 'scoped memory for tpu_custom_call.1']
    #allocation5 [shape = 's32[1]{0}', space=sflag, size = 0x4, scoped, tag = 'scoped memory for tpu_custom_call.1']
    #allocation6 [shape = 'u8[32768]{0}', space=vmem, size = 0x8000, scoped, tag = 'input window, operand 3, single buffered']
    #allocation7 [shape = 's32[1]{0}', space=sflag, size = 0x4, scoped, tag = 'scoped memory for tpu_custom_call.1']
    #allocation8 [shape = 'u8[1024]{0}', space=vmem, size = 0x400, scoped, tag = 'output window, operand 0, single buffered']
    %10 = vsyncpa [#allocation4], 0
    %11 = vsyncpa [#allocation7], 0
    %12 = vsyncpa [#allocation5], 0
    // Predicated region
    $region2: #{tpu_custom_call.1} parent=1 // pred_check
      _
    $region3: #{tpu_custom_call.1} parent=1 // pred_check_branch
      %14 = sbr.rel (0) target = $region5
    $region4: #{tpu_custom_call.1} parent=1 // pred_region
      _
    $region5: #{tpu_custom_call.1} parent=1 // pred_fallthru
      _
    // Predicated region
    $region6: #{tpu_custom_call.1} parent=1 // pred_check
      _
    $region7: #{tpu_custom_call.1} parent=1 // pred_check_branch
      %16 = sbr.rel (0) target = $region9
    $region8: #{tpu_custom_call.1} parent=1 // pred_region
      %s18 = ssub.s32 2048, 2048
      %19 = vsyncadd [#allocation4], %s18
      %s20 = sshll.u32 [#allocation3], 4
      %s21 = int_to_ptr.vmem [resolvable:$true] %s20
      %26 = dma.hbm_to_vmem [thread:$0]  %s1, 2048, %s21, [#allocation4], 64, 64, 4
    $region9: #{tpu_custom_call.1} parent=1 // pred_fallthru
      _
    // Predicated region
    $region10: #{tpu_custom_call.1} parent=1 // pred_check
      _
    $region11: #{tpu_custom_call.1} parent=1 // pred_check_branch
      %28 = sbr.rel (0) target = $region13
    $region12: #{tpu_custom_call.1} parent=1 // pred_region
      _
    $region13: #{tpu_custom_call.1} parent=1 // pred_fallthru
      _
    // Predicated region
    $region14: #{tpu_custom_call.1} parent=1 // pred_check
      _
    $region15: #{tpu_custom_call.1} parent=1 // pred_check_branch
      %30 = sbr.rel (0) target = $region17
    $region16: #{tpu_custom_call.1} parent=1 // pred_region
      %s32 = ssub.s32 1024, 1024
      %33 = vsyncadd [#allocation7], %s32
      %s34 = sshll.u32 [#allocation6], 4
      %s35 = int_to_ptr.vmem [resolvable:$true] %s34
      %40 = dma.hbm_to_vmem [thread:$0]  %s3, 1024, %s35, [#allocation7], 64, 64, 4
    $region17: #{tpu_custom_call.1} parent=1 // pred_fallthru
      _
    // Predicated region
    $region18: #{tpu_custom_call.1} parent=1 // pred_check
      _
    $region19: #{tpu_custom_call.1} parent=1 // pred_check_branch
      %42 = sbr.rel (0) target = $region21
    $region20: #{tpu_custom_call.1} parent=1 // pred_region
      _
    $region21: #{tpu_custom_call.1} parent=1 // pred_fallthru
      _
    // Predicated region
    $region22: #{tpu_custom_call.1} parent=1 // pred_check
      _
    $region23: #{tpu_custom_call.1} parent=1 // pred_check_branch
      %44 = sbr.rel (0) target = $region25
    $region24: #{tpu_custom_call.1} parent=1 // pred_region
      %45 = dma.done [#allocation4], 2048
    $region25: #{tpu_custom_call.1} parent=1 // pred_fallthru
      _
    // Predicated region
    $region26: #{tpu_custom_call.1} parent=1 // pred_check
      _
    $region27: #{tpu_custom_call.1} parent=1 // pred_check_branch
      %47 = sbr.rel (0) target = $region29
    $region28: #{tpu_custom_call.1} parent=1 // pred_region
      %48 = dma.done [#allocation7], 1024
    $region29: #{tpu_custom_call.1} parent=1 // pred_fallthru
      _
    %v50 = vld [vmem:[%s0] sm:$0xf]
    %v51 = vld [vmem:[%s0 + $0x4] sm:$0xf]
    %v52 = vld [vmem:[%s0 + $0xc] sm:$0xf]
    %v53 = vld [vmem:[%s0 + $0x10] sm:$0xf]
    %v58 = vunpack.c.l.b16 %v50
    %v59 = vunpack.c.l.b16 %v51
    %v60 = vunpack.c.l.b16 %v52
    %v61 = vunpack.c.l.b16 %v53
    %v62 = vpack.c.b16 %v59, %v58
    %v63 = vpack.c.b16 %v61, %v60
    %vm66 = vcmask 261120
    %67 = vst.msk [vmem:[#allocation2] sm:$0xff] %vm66, %v62
    %68 = vst.msk [vmem:[#allocation2 + $0x10] sm:$0xff] %vm66, %v63
    %v69 = vld [vmem:[%s0] sm:$0xf]
    %v70 = vld [vmem:[%s0 + $0x4] sm:$0xf]
    %v71 = vld [vmem:[%s0 + $0x8] sm:$0x1]
    %v72 = vld [vmem:[%s0 + $0xc] sm:$0xf]
    %v73 = vld [vmem:[%s0 + $0x10] sm:$0xf]
    %v74 = vld [vmem:[%s0 + $0x14] sm:$0x1]
    %v81 = vunpack.c.l.b16 %v69
    %v82 = vunpack.c.l.b16 %v70
    %v83 = vunpack.c.l.b16 %v71
    %v84 = vunpack.c.l.b16 %v72
    %v85 = vunpack.c.l.b16 %v73
    %v86 = vunpack.c.l.b16 %v74
    %v87 = vpack.c.b16 %v82, %v81
    %v88 = vpack.c.b16 %v83, %v83
    %v89 = vpack.c.b16 %v85, %v84
    %v90 = vpack.c.b16 %v86, %v86
    %vm91 = vsmask.f32 7424
    %v93 = vshrl.u32 %v87, 16
    %v95 = vshll.u32 %v87, 16
    %v97 = vrot.slane %v95, 1
    %v98 = vor.u32 %v93, %v97
    %v100 = vshll.u32 %v88, 16
    %v102 = vrot.slane %v100, 1
    %v103 = vsel %vm91, %v98, %v102
    %v105 = vshrl.u32 %v89, 16
    %v107 = vshll.u32 %v89, 16
    %v109 = vrot.slane %v107, 1
    %v110 = vor.u32 %v105, %v109
    %v112 = vshll.u32 %v90, 16
    %v114 = vrot.slane %v112, 1
    %v115 = vsel %vm91, %v110, %v114
    %116 = vrot.lane.b32.xlu0 %v103, 32
    %v117 = vpop.permute.xlu0 %116
    %118 = vrot.lane.b32.xlu0 %v115, 32
    %v119 = vpop.permute.xlu0 %118
    %vm122 = vcmask 523520
    %123 = vst.msk [vmem:[#allocation2] sm:$0xff] %vm122, %v117
    %124 = vst.msk [vmem:[#allocation2 + $0x10] sm:$0xff] %vm122, %v119
    %v125 = vld [vmem:[%s0] sm:$0xe]
    %v126 = vld [vmem:[%s0 + $0x4] sm:$0xf]
    %v127 = vld [vmem:[%s0 + $0x8] sm:$0x1]
    %v128 = vld [vmem:[%s0 + $0xc] sm:$0xe]
    %v129 = vld [vmem:[%s0 + $0x10] sm:$0xf]
    %v130 = vld [vmem:[%s0 + $0x14] sm:$0x1]
    %v137 = vunpack.c.l.b16 %v125
    %v138 = vunpack.c.l.b16 %v126
    %v139 = vunpack.c.l.b16 %v127
    %v140 = vunpack.c.l.b16 %v128
    %v141 = vunpack.c.l.b16 %v129
    %v142 = vunpack.c.l.b16 %v130
    %v143 = vpack.c.b16 %v138, %v137
    %v144 = vpack.c.b16 %v139, %v139
    %v145 = vpack.c.b16 %v141, %v140
    %v146 = vpack.c.b16 %v142, %v142
    %vm147 = vcmask 1046528
    %v148 = vrot.slane %v143, 1
    %v149 = vrot.slane %v144, 1
    %v150 = vsel %vm147, %v148, %v149
    %v151 = vrot.slane %v145, 1
    %v152 = vrot.slane %v146, 1
    %v153 = vsel %vm147, %v151, %v152
    %154 = vrot.lane.b32.xlu0 %v150, 64
    %v155 = vpop.permute.xlu0 %154
    %156 = vrot.lane.b32.xlu0 %v153, 64
    %v157 = vpop.permute.xlu0 %156
    %vm160 = vcmask 785920
    %161 = vst.msk [vmem:[#allocation2] sm:$0xff] %vm160, %v155
    %162 = vst.msk [vmem:[#allocation2 + $0x10] sm:$0xff] %vm160, %v157
    %v163 = vld [vmem:[%s0] sm:$0xe]
    %v164 = vld [vmem:[%s0 + $0x4] sm:$0xf]
    %v165 = vld [vmem:[%s0 + $0x8] sm:$0x3]
    %v166 = vld [vmem:[%s0 + $0xc] sm:$0xe]
    %v167 = vld [vmem:[%s0 + $0x10] sm:$0xf]
    %v168 = vld [vmem:[%s0 + $0x14] sm:$0x3]
    %v175 = vunpack.c.l.b16 %v163
    %v176 = vunpack.c.l.b16 %v164
    %v177 = vunpack.c.l.b16 %v165
    %v178 = vunpack.c.l.b16 %v166
    %v179 = vunpack.c.l.b16 %v167
    %v180 = vunpack.c.l.b16 %v168
    %v181 = vpack.c.b16 %v176, %v175
    %v182 = vpack.c.b16 %v177, %v177
    %v183 = vpack.c.b16 %v179, %v178
    %v184 = vpack.c.b16 %v180, %v180
    %vm185 = vsmask.f32 6400
    %v187 = vshrl.u32 %v181, 16
    %v189 = vrot.slane %v187, 1
    %v190 = vshll.u32 %v181, 16
    %v192 = vrot.slane %v190, 2
    %v193 = vor.u32 %v189, %v192
    %v195 = vshrl.u32 %v182, 16
    %v197 = vrot.slane %v195, 1
    %v198 = vshll.u32 %v182, 16
    %v200 = vrot.slane %v198, 2
    %v201 = vor.u32 %v197, %v200
    %v202 = vsel %vm185, %v193, %v201
    %v204 = vshrl.u32 %v183, 16
    %v206 = vrot.slane %v204, 1
    %v207 = vshll.u32 %v183, 16
    %v209 = vrot.slane %v207, 2
    %v210 = vor.u32 %v206, %v209
    %v212 = vshrl.u32 %v184, 16
    %v214 = vrot.slane %v212, 1
    %v215 = vshll.u32 %v184, 16
    %v217 = vrot.slane %v215, 2
    %v218 = vor.u32 %v214, %v217
    %v219 = vsel %vm185, %v210, %v218
    %220 = vrot.lane.b32.xlu0 %v202, 96
    %v221 = vpop.permute.xlu0 %220
    %222 = vrot.lane.b32.xlu0 %v219, 96
    %v223 = vpop.permute.xlu0 %222
    %vm226 = vcmask 1048320
    %227 = vst.msk [vmem:[#allocation2] sm:$0xff] %vm226, %v221
    %228 = vst.msk [vmem:[#allocation2 + $0x10] sm:$0xff] %vm226, %v223
    %v229 = vld [vmem:[%s0] sm:$0xc]
    %v230 = vld [vmem:[%s0 + $0x4] sm:$0xf]
    %v231 = vld [vmem:[%s0 + $0x8] sm:$0x3]
    %v232 = vld [vmem:[%s0 + $0xc] sm:$0xc]
    %v233 = vld [vmem:[%s0 + $0x10] sm:$0xf]
    %v234 = vld [vmem:[%s0 + $0x14] sm:$0x3]
    %v241 = vunpack.c.l.b16 %v229
    %v242 = vunpack.c.l.b16 %v230
    %v243 = vunpack.c.l.b16 %v231
    %v244 = vunpack.c.l.b16 %v232
    %v245 = vunpack.c.l.b16 %v233
    %v246 = vunpack.c.l.b16 %v234
    %v247 = vpack.c.b16 %v242, %v241
    %v248 = vpack.c.b16 %v243, %v243
    %v249 = vpack.c.b16 %v245, %v244
    %v250 = vpack.c.b16 %v246, %v246
    %vm251 = vcmask 1045504
    %v252 = vrot.slane %v247, 2
    %v253 = vrot.slane %v248, 2
    %v254 = vsel %vm251, %v252, %v253
    %v255 = vrot.slane %v249, 2
    %v256 = vrot.slane %v250, 2
    %v257 = vsel %vm251, %v255, %v256
    %260 = vst.msk [vmem:[#allocation2 + $0x8] sm:$0xff] %vm66, %v254
    %261 = vst.msk [vmem:[#allocation2 + $0x18] sm:$0xff] %vm66, %v257
    %vm262 = vcmask 1047808
    %263 = vst.msk [vmem:[#allocation2 + $0x8] sm:$0xff] %vm262, 0
    %264 = vst.msk [vmem:[#allocation2 + $0x18] sm:$0xff] %vm262, 0
    %v265 = vld [vmem:[#allocation2] sm:$0xff]
    %v266 = vld [vmem:[#allocation2 + $0x8] sm:$0xff]
    %v267 = vld [vmem:[#allocation2 + $0x10] sm:$0xff]
    %v268 = vld [vmem:[#allocation2 + $0x18] sm:$0xff]
    %v269 = vld [vmem:[#allocation3] sm:$0xf]
    %v270 = vld [vmem:[#allocation3 + $0x4] sm:$0xf]
    %v271 = vld [vmem:[#allocation3 + $0x8] sm:$0xf]
    %v272 = vld [vmem:[#allocation3 + $0xc] sm:$0xf]
    %v273 = vld [vmem:[#allocation3 + $0x10] sm:$0xf]
    %v274 = vld [vmem:[#allocation3 + $0x14] sm:$0xf]
    %v275 = vld [vmem:[#allocation3 + $0x18] sm:$0xf]
    %v276 = vld [vmem:[#allocation3 + $0x1c] sm:$0xf]
    %v277 = vld [vmem:[#allocation3 + $0x20] sm:$0xf]
    %v278 = vld [vmem:[#allocation3 + $0x24] sm:$0xf]
    %v279 = vld [vmem:[#allocation3 + $0x28] sm:$0xf]
    %v280 = vld [vmem:[#allocation3 + $0x2c] sm:$0xf]
    %v281 = vld [vmem:[#allocation3 + $0x30] sm:$0xf]
    %v282 = vld [vmem:[#allocation3 + $0x34] sm:$0xf]
    %v283 = vld [vmem:[#allocation3 + $0x38] sm:$0xf]
    %v284 = vld [vmem:[#allocation3 + $0x3c] sm:$0xf]
    %v285 = vld [vmem:[#allocation3 + $0x40] sm:$0xf]
    %v286 = vld [vmem:[#allocation3 + $0x44] sm:$0xf]
    %v287 = vld [vmem:[#allocation3 + $0x48] sm:$0xf]
    %v288 = vld [vmem:[#allocation3 + $0x4c] sm:$0xf]
    %v289 = vld [vmem:[#allocation3 + $0x50] sm:$0xf]
    %v290 = vld [vmem:[#allocation3 + $0x54] sm:$0xf]
    %v291 = vld [vmem:[#allocation3 + $0x58] sm:$0xf]
    %v292 = vld [vmem:[#allocation3 + $0x5c] sm:$0xf]
    %v293 = vld [vmem:[#allocation3 + $0x60] sm:$0xf]
    %v294 = vld [vmem:[#allocation3 + $0x64] sm:$0xf]
    %v295 = vld [vmem:[#allocation3 + $0x68] sm:$0xf]
    %v296 = vld [vmem:[#allocation3 + $0x6c] sm:$0xf]
    %v297 = vld [vmem:[#allocation3 + $0x70] sm:$0xf]
    %v298 = vld [vmem:[#allocation3 + $0x74] sm:$0xf]
    %v299 = vld [vmem:[#allocation3 + $0x78] sm:$0xf]
    %v300 = vld [vmem:[#allocation3 + $0x7c] sm:$0xf]
    %v333 = vunpack.c.l.b16 %v269
    %v334 = vunpack.c.l.b16 %v270
    %v335 = vunpack.c.l.b16 %v271
    %v336 = vunpack.c.l.b16 %v272
    %v337 = vunpack.c.l.b16 %v273
    %v338 = vunpack.c.l.b16 %v274
    %v339 = vunpack.c.l.b16 %v275
    %v340 = vunpack.c.l.b16 %v276
    %v341 = vunpack.c.l.b16 %v277
    %v342 = vunpack.c.l.b16 %v278
    %v343 = vunpack.c.l.b16 %v279
    %v344 = vunpack.c.l.b16 %v280
    %v345 = vunpack.c.l.b16 %v281
    %v346 = vunpack.c.l.b16 %v282
    %v347 = vunpack.c.l.b16 %v283
    %v348 = vunpack.c.l.b16 %v284
    %v349 = vunpack.c.l.b16 %v285
    %v350 = vunpack.c.l.b16 %v286
    %v351 = vunpack.c.l.b16 %v287
    %v352 = vunpack.c.l.b16 %v288
    %v353 = vunpack.c.l.b16 %v289
    %v354 = vunpack.c.l.b16 %v290
    %v355 = vunpack.c.l.b16 %v291
    %v356 = vunpack.c.l.b16 %v292
    %v357 = vunpack.c.l.b16 %v293
    %v358 = vunpack.c.l.b16 %v294
    %v359 = vunpack.c.l.b16 %v295
    %v360 = vunpack.c.l.b16 %v296
    %v361 = vunpack.c.l.b16 %v297
    %v362 = vunpack.c.l.b16 %v298
    %v363 = vunpack.c.l.b16 %v299
    %v364 = vunpack.c.l.b16 %v300
    %v365 = vpack.c.b16 %v334, %v333
    %v366 = vpack.c.b16 %v336, %v335
    %v367 = vpack.c.b16 %v338, %v337
    %v368 = vpack.c.b16 %v340, %v339
    %v369 = vpack.c.b16 %v342, %v341
    %v370 = vpack.c.b16 %v344, %v343
    %v371 = vpack.c.b16 %v346, %v345
    %v372 = vpack.c.b16 %v348, %v347
    %v373 = vpack.c.b16 %v350, %v349
    %v374 = vpack.c.b16 %v352, %v351
    %v375 = vpack.c.b16 %v354, %v353
    %v376 = vpack.c.b16 %v356, %v355
    %v377 = vpack.c.b16 %v358, %v357
    %v378 = vpack.c.b16 %v360, %v359
    %v379 = vpack.c.b16 %v362, %v361
    %v380 = vpack.c.b16 %v364, %v363
    %397 = vmatprep.subr.bf16.mxu0 0
    %398 = vmatpush1.bf16.msra.mxu0 %v365
    %399 = vmatprep.subr.bf16.mxu0 0
    %400 = vmatpush1.bf16.msra.mxu0 %v366
    %401 = vmatprep.subr.bf16.mxu0 0
    %402 = vmatpush1.bf16.msra.mxu0 %v367
    %403 = vmatprep.subr.bf16.mxu0 0
    %404 = vmatpush1.bf16.msra.mxu0 %v368
    %405 = vmatprep.subr.bf16.mxu0 0
    %406 = vmatpush1.bf16.msra.mxu0 %v369
    %407 = vmatprep.subr.bf16.mxu0 0
    %408 = vmatpush1.bf16.msra.mxu0 %v370
    %409 = vmatprep.subr.bf16.mxu0 0
    %410 = vmatpush1.bf16.msra.mxu0 %v371
    %411 = vmatprep.subr.bf16.mxu0 0
    %412 = vmatpush1.bf16.msra.mxu0 %v372
    %413 = vmatprep.subr.bf16.mxu0 0
    %414 = vmatpush1.bf16.msra.mxu0 %v373
    %415 = vmatprep.subr.bf16.mxu0 0
    %416 = vmatpush1.bf16.msra.mxu0 %v374
    %417 = vmatprep.subr.bf16.mxu0 0
    %418 = vmatpush1.bf16.msra.mxu0 %v375
    %419 = vmatprep.subr.bf16.mxu0 0
    %420 = vmatpush1.bf16.msra.mxu0 %v376
    %421 = vmatprep.subr.bf16.mxu0 0
    %422 = vmatpush1.bf16.msra.mxu0 %v377
    %423 = vmatprep.subr.bf16.mxu0 0
    %424 = vmatpush1.bf16.msra.mxu0 %v378
    %425 = vmatprep.subr.bf16.mxu0 0
    %426 = vmatpush1.bf16.msra.mxu0 %v379
    %427 = vmatprep.subr.bf16.mxu0 0
    %428 = vmatpush1.bf16.msra.mxu0 %v380
    %429 = vmatprep.mubr.bf16.mxu0 %v266
    %430 = vmatmul.mubr.bf16.gmra.mrb[0].mxu0 %v265
    %v431 = vpop.f32.mrb[0].mxu0
    %v432 = vadd.f32 0.0, %v431
    %v433 = vpop.f32.mrb[0].mxu0
    %v434 = vpop.f32.mrb[0].mxu0
    %v435 = vadd.f32 0.0, %v434
    %v436 = vpop.f32.mrb[0].mxu0
    %437 = vmatprep.mubr.bf16.mxu0 %v268
    %438 = vmatmul.mubr.bf16.gmra.mrb[0].mxu0 %v267
    %v439 = vpop.f32.mrb[0].mxu0
    %v440 = vadd.f32 0.0, %v439
    %v441 = vpop.f32.mrb[0].mxu0
    %v442 = vpop.f32.mrb[0].mxu0
    %v443 = vadd.f32 0.0, %v442
    %v444 = vpop.f32.mrb[0].mxu0
    %445 = vdwg.mxu0
    %v446 = vmax.f32 %v432, %v435
    %v447 = vrot.slane %v446, 4
    %v448 = vmax.f32 %v446, %v447
    %v449 = vrot.slane %v448, 2
    %v450 = vmax.f32 %v448, %v449
    %v451 = vrot.slane %v450, 1
    %v452 = vmax.f32 %v450, %v451
    %v453 = vmax.f32 %v440, %v443
    %v454 = vrot.slane %v453, 4
    %v455 = vmax.f32 %v453, %v454
    %v456 = vrot.slane %v455, 2
    %v457 = vmax.f32 %v455, %v456
    %v458 = vrot.slane %v457, 1
    %v459 = vmax.f32 %v457, %v458
    %v460 = vld [vmem:[%s2] sm:$0x1]
    %v462 = vlaneseq
    %v463 = vshrl.u32 %v462, 7
    %v464 = vsub.s32 0, %v463
    %v465 = vrot.slane %v460, %v464
    %v467 = vadd.f32 %v452, %v465
    %v468 = vadd.f32 %v459, %v465
    %v469 = vmax.f32 %v467, 0.0
    %v470 = vmax.f32 %v468, 0.0
    %v471 = vpack.c.bf16 %v469, %v469
    %v472 = vpack.c.bf16 %v470, %v470
    %v473 = vld [vmem:[#allocation6] sm:$0xf]
    %v474 = vld [vmem:[#allocation6 + $0x4] sm:$0xf]
    %v475 = vld [vmem:[#allocation6 + $0x8] sm:$0xf]
    %v476 = vld [vmem:[#allocation6 + $0xc] sm:$0xf]
    %v477 = vld [vmem:[#allocation6 + $0x10] sm:$0xf]
    %v478 = vld [vmem:[#allocation6 + $0x14] sm:$0xf]
    %v479 = vld [vmem:[#allocation6 + $0x18] sm:$0xf]
    %v480 = vld [vmem:[#allocation6 + $0x1c] sm:$0xf]
    %v481 = vld [vmem:[#allocation6 + $0x20] sm:$0xf]
    %v482 = vld [vmem:[#allocation6 + $0x24] sm:$0xf]
    %v483 = vld [vmem:[#allocation6 + $0x28] sm:$0xf]
    %v484 = vld [vmem:[#allocation6 + $0x2c] sm:$0xf]
    %v485 = vld [vmem:[#allocation6 + $0x30] sm:$0xf]
    %v486 = vld [vmem:[#allocation6 + $0x34] sm:$0xf]
    %v487 = vld [vmem:[#allocation6 + $0x38] sm:$0xf]
    %v488 = vld [vmem:[#allocation6 + $0x3c] sm:$0xf]
    %v489 = vld [vmem:[%s4] sm:$0x1]
    %v491 = vlaneseq
    %v492 = vshrl.u32 %v491, 7
    %v493 = vsub.s32 0, %v492
    %v494 = vrot.slane %v489, %v493
    %v498 = vunpack.c.l.b16 %v471
    %v499 = vunpack.c.l.b16 %v472
    %v500 = vrot.slane %v499, 7
    %vm501 = vcmask 1041409
    %v502 = vsel %vm501, %v500, %v498
    %v503 = vpack.c.b16 %v502, %v502
    %v521 = vunpack.c.l.b16 %v473
    %v522 = vunpack.c.l.b16 %v474
    %v523 = vunpack.c.l.b16 %v475
    %v524 = vunpack.c.l.b16 %v476
    %v525 = vunpack.c.l.b16 %v477
    %v526 = vunpack.c.l.b16 %v478
    %v527 = vunpack.c.l.b16 %v479
    %v528 = vunpack.c.l.b16 %v480
    %v529 = vunpack.c.l.b16 %v481
    %v530 = vunpack.c.l.b16 %v482
    %v531 = vunpack.c.l.b16 %v483
    %v532 = vunpack.c.l.b16 %v484
    %v533 = vunpack.c.l.b16 %v485
    %v534 = vunpack.c.l.b16 %v486
    %v535 = vunpack.c.l.b16 %v487
    %v536 = vunpack.c.l.b16 %v488
    %v537 = vpack.c.b16 %v522, %v521
    %v538 = vpack.c.b16 %v524, %v523
    %v539 = vpack.c.b16 %v526, %v525
    %v540 = vpack.c.b16 %v528, %v527
    %v541 = vpack.c.b16 %v530, %v529
    %v542 = vpack.c.b16 %v532, %v531
    %v543 = vpack.c.b16 %v534, %v533
    %v544 = vpack.c.b16 %v536, %v535
    %553 = vmatprep.subr.bf16.mxu0 0
    %554 = vmatpush1.bf16.msra.mxu0 %v537
    %555 = vmatprep.subr.bf16.mxu0 0
    %556 = vmatpush1.bf16.msra.mxu0 %v538
    %557 = vmatprep.subr.bf16.mxu0 0
    %558 = vmatpush1.bf16.msra.mxu0 %v539
    %559 = vmatprep.subr.bf16.mxu0 0
    %560 = vmatpush1.bf16.msra.mxu0 %v540
    %561 = vmatprep.subr.bf16.mxu0 0
    %562 = vmatpush1.bf16.msra.mxu0 %v541
    %563 = vmatprep.subr.bf16.mxu0 0
    %564 = vmatpush1.bf16.msra.mxu0 %v542
    %565 = vmatprep.subr.bf16.mxu0 0
    %566 = vmatpush1.bf16.msra.mxu0 %v543
    %567 = vmatprep.subr.bf16.mxu0 0
    %568 = vmatpush1.bf16.msra.mxu0 %v544
    %569 = vmatprep.subr.bf16.mxu0 0
    %570 = vmatpush1.bf16.msra.mxu0 0
    %571 = vmatprep.subr.bf16.mxu0 0
    %572 = vmatpush1.bf16.msra.mxu0 0
    %573 = vmatprep.subr.bf16.mxu0 0
    %574 = vmatpush1.bf16.msra.mxu0 0
    %575 = vmatprep.subr.bf16.mxu0 0
    %576 = vmatpush1.bf16.msra.mxu0 0
    %577 = vmatprep.subr.bf16.mxu0 0
    %578 = vmatpush1.bf16.msra.mxu0 0
    %579 = vmatprep.subr.bf16.mxu0 0
    %580 = vmatpush1.bf16.msra.mxu0 0
    %581 = vmatprep.subr.bf16.mxu0 0
    %582 = vmatpush1.bf16.msra.mxu0 0
    %583 = vmatprep.subr.bf16.mxu0 0
    %584 = vmatpush1.bf16.msra.mxu0 0
    %585 = vmatprep.mubr.bf16.mxu0 0
    %586 = vmatmul.mubr.bf16.gmra.mrb[0].mxu0 %v503
    %v587 = vpop.f32.mrb[0].mxu0
    %v588 = vadd.f32 %v494, %v587
    %v589 = vpop.f32.mrb[0].mxu0
    %v590 = vpop.f32.mrb[0].mxu0
    %v591 = vpop.f32.mrb[0].mxu0
    %592 = vdwg.mxu0
    %593 = vst [vmem:[#allocation8] sm:$0x3] %v588
    // Predicated region
    $region30: #{tpu_custom_call.1} parent=1 // pred_check
      _
    $region31: #{tpu_custom_call.1} parent=1 // pred_check_branch
      %595 = sbr.rel (0) target = $region33
    $region32: #{tpu_custom_call.1} parent=1 // pred_region
      %s597 = ssub.s32 32, 32
      %598 = vsyncadd [#allocation5], %s597
      %s600 = sshll.u32 [#allocation8], 4
      %s601 = int_to_ptr.vmem [resolvable:$true] %s600
      %603 = dma.vmem_to_hbm [thread:$0]  %s601, 32, %s5, [#allocation5]
    $region33: #{tpu_custom_call.1} parent=1 // pred_fallthru
      _
    // Predicated region
    $region34: #{tpu_custom_call.1} parent=1 // pred_check
      _
    $region35: #{tpu_custom_call.1} parent=1 // pred_check_branch
      %605 = sbr.rel (0) target = $region37
    $region36: #{tpu_custom_call.1} parent=1 // pred_region
      %606 = dma.done [#allocation5], 32
    $region37: #{tpu_custom_call.1} parent=1 // pred_fallthru
      _
    %607 = vsyncpa [#allocation4], 1
    %608 = vsyncpa [#allocation7], 1
    %609 = vsyncpa [#allocation5], 1

</llo_original>
